<compile_context>
chip_gen: v7x
topology: tpu7x:2x2x1
jax: 0.10.0
libtpu: 0.0.40
codegen_flags: <defaults>
</compile_context>

<pallas_src>
import math
import functools

import jax
import jax.numpy as jnp
from jax import lax
from jax.experimental import pallas as pl
from jax.experimental.pallas import tpu as pltpu


# ---------------------------------------------------------------------------
# Fused MHA kernel: single program, whole batch + all heads in-body.
# ---------------------------------------------------------------------------

def mha_fused_kernel(xcat_ref, wqkv_ref, bqkv_ref, wp_ref, bp_ref, bias_ref,
                     o_ref, concat_ref, *, N, S, T, D, num_heads):
    # xcat: (N*S + 2*N*T, D) row-stacked [xq; xk; xv]
    # wqkv: (D, 3D) lane-stacked [Wq^T * scale | Wk^T | Wv^T]; bqkv: (1, 3D)
    # wp:   (D, D) = Wp^T; bp: (1, D); bias: (S, T) additive mask; o: (N*S, D)
    # concat_ref: (N*S, D) VMEM scratch holding the per-head outputs side by side.
    hd = D // num_heads
    NS, NT = N * S, N * T

    # ONE wide projection matmul.  Only the block-diagonal row/lane blocks are used;
    # the few wasted FLOPs are negligible while the MXU gets a single 96-lane weight
    # push instead of 3*h narrow (D, hd) ones.
    p = jnp.dot(xcat_ref[...], wqkv_ref[...], preferred_element_type=jnp.float32)
    p = p + bqkv_ref[...]

    bias = bias_ref[...]  # (S, T) additive mask bias (0 attend / -1e30 masked)

    # NOTE: static unroll is fine for N*h == 4; switch to lax.fori_loop(..., unroll=True)
    # with the accumulator kept in VMEM scratch if num_heads grows (vreg live ranges).
    for n in range(N):
        for hh in range(num_heads):
            c0 = hh * hd
            # Static slices out of the fused projection result.
            q_nh = p[n * S:(n + 1) * S, c0:c0 + hd]                           # (S, hd)
            k_nh = p[NS + n * T:NS + (n + 1) * T, D + c0:D + c0 + hd]         # (T, hd)
            v_nh = p[NS + NT + n * T:NS + NT + (n + 1) * T,
                     2 * D + c0:2 * D + c0 + hd]                              # (T, hd)

            # Scores without an explicit K transpose (contract the last dims).
            # The 1/sqrt(hd) scale is already folded into Wq/bq.
            s = lax.dot_general(q_nh, k_nh, (((1,), (1,)), ((), ())),
                                preferred_element_type=jnp.float32) + bias    # (S, T)

            # Numerically stable softmax (dim=-1), exact reciprocal.
            m = jnp.max(s, axis=-1, keepdims=True)
            e = jnp.exp(s - m)
            l = jnp.sum(e, axis=-1, keepdims=True)
            a = e * pl.reciprocal(l, approx=False)

            # Dropout is identity (eval mode).  Attention output for this head.
            y_nh = jnp.dot(a, v_nh, preferred_element_type=jnp.float32)       # (S, hd)

            # Head "concat" = lane-slice write into the (N*S, D) scratch.
            concat_ref[n * S:(n + 1) * S, c0:c0 + hd] = y_nh

    # Output projection: single (N*S, D) @ (D, D) matmul against the un-split Wp.
    out = jnp.dot(concat_ref[...], wp_ref[...], preferred_element_type=jnp.float32)
    o_ref[...] = out + bp_ref[...]


# ---------------------------------------------------------------------------
# Wrapper: one-time weight/layout prep + a single pallas_call.
# ---------------------------------------------------------------------------

def multi_head_attention(params, query, key, value, attn_mask=None, num_heads=2):
    N, S, D = query.shape
    _, T, _ = value.shape
    h = num_heads
    hd = D // h
    scale = 1.0 / math.sqrt(D / h)  # == 1/sqrt(hd); exact power of two here (0.25)
    f32 = jnp.float32

    # PyTorch nn.Linear stores W as (out, in): y = x @ W^T + b.  Scale folded into Wq/bq.
    wq_t = jnp.transpose(params["wq"]).astype(f32) * scale                      # (D, D)
    wk_t = jnp.transpose(params["wk"]).astype(f32)
    wv_t = jnp.transpose(params["wv"]).astype(f32)
    w_qkv = jnp.concatenate([wq_t, wk_t, wv_t], axis=1)                         # (D, 3D)
    b_qkv = jnp.concatenate([params["bq"].astype(f32) * scale,
                             params["bk"].astype(f32),
                             params["bv"].astype(f32)]).reshape(1, 3 * D)       # (1, 3D)
    wp_t = jnp.transpose(params["wp"]).astype(f32)                              # (D, D)
    bp = params["bp"].astype(f32).reshape(1, D)                                 # (1, D)

    # Row-stack the activations so the QKV projection is ONE matmul even when
    # query/key/value are different tensors (pure layout plumbing, done once).
    x_cat = jnp.concatenate([query.reshape(N * S, D).astype(f32),
                             key.reshape(N * T, D).astype(f32),
                             value.reshape(N * T, D).astype(f32)], axis=0)
    R = N * S + 2 * N * T

    # Additive mask bias: no per-element compare+select in-kernel, no -inf/NaN hazard.
    if attn_mask is None:
        bias = jnp.zeros((S, T), f32)
    else:
        bias = jnp.where(attn_mask.astype(f32) != 0.0, 0.0, -1e30).astype(f32)

    kernel = functools.partial(mha_fused_kernel, N=N, S=S, T=T, D=D, num_heads=h)

    flops = (2 * R * D * 3 * D                              # fused QKV projection
             + N * h * (2 * S * T * hd + 2 * S * T * hd)    # scores + A @ V per (n, head)
             + 2 * (N * S) * D * D)                         # output projection
    bytes_accessed = 4 * (R * D + D * 3 * D + 3 * D + D * D + D + S * T + N * S * D)
    cost = pl.CostEstimate(flops=flops, transcendentals=N * h * S * T,
                           bytes_accessed=bytes_accessed)

    out_flat = pl.pallas_call(
        kernel,
        out_shape=jax.ShapeDtypeStruct((N * S, D), f32),
        grid=(1,),                                           # single program, batch folded
        in_specs=[
            pl.BlockSpec((R, D), lambda i: (0, 0)),          # [xq; xk; xv]
            pl.BlockSpec((D, 3 * D), lambda i: (0, 0)),      # [Wq^T*scale | Wk^T | Wv^T]
            pl.BlockSpec((1, 3 * D), lambda i: (0, 0)),      # [bq*scale | bk | bv]
            pl.BlockSpec((D, D), lambda i: (0, 0)),          # Wp^T
            pl.BlockSpec((1, D), lambda i: (0, 0)),          # bp
            pl.BlockSpec((S, T), lambda i: (0, 0)),          # additive mask bias
        ],
        out_specs=pl.BlockSpec((N * S, D), lambda i: (0, 0)),
        scratch_shapes=[pltpu.VMEM((N * S, D), f32)],        # head-concat buffer
        compiler_params=pltpu.CompilerParams(dimension_semantics=("arbitrary",)),
        cost_estimate=cost,
    )(x_cat, w_qkv, b_qkv, wp_t, bp, bias)

    return out_flat.reshape(N, S, D)


# ---------------------------------------------------------------------------
# Pure-JAX reference (full f32 precision) for correctness checking.
# ---------------------------------------------------------------------------

def reference_mha(params, query, key, value, attn_mask, num_heads):
    N, S, D = query.shape
    _, T, _ = value.shape
    h = num_heads
    hd = D // h
    HI = jax.lax.Precision.HIGHEST

    def lin(x, w, b):
        return jnp.einsum("...d,od->...o", x, w, precision=HI) + b

    q = lin(query, params["wq"], params["bq"]).reshape(N, S, h, hd).transpose(0, 2, 1, 3)
    k = lin(key, params["wk"], params["bk"]).reshape(N, T, h, hd).transpose(0, 2, 1, 3)
    v = lin(value, params["wv"], params["bv"]).reshape(N, T, h, hd).transpose(0, 2, 1, 3)

    s = jnp.einsum("nhsd,nhtd->nhst", q, k, precision=HI) / math.sqrt(D / h)
    if attn_mask is not None:
        s = jnp.where(attn_mask[None, None] == 0, -jnp.inf, s)
    a = jax.nn.softmax(s, axis=-1)
    y = jnp.einsum("nhst,nhtd->nhsd", a, v, precision=HI)
    concat = y.transpose(0, 2, 1, 3).reshape(N, S, D)
    return lin(concat, params["wp"], params["bp"])


# ---------------------------------------------------------------------------
# Main
# ---------------------------------------------------------------------------

if __name__ == "__main__":
    # Small shapes consistent with the module: batch=2, seq=8, embed_dim=32, heads=2.
    N, S, T, E, H = 2, 8, 8, 32, 2

    key0 = jax.random.PRNGKey(0)
    keys = jax.random.split(key0, 12)

    bound = 1.0 / math.sqrt(E)  # PyTorch nn.Linear default init range

    def init_linear(kw, kb):
        w = jax.random.uniform(kw, (E, E), jnp.float32, -bound, bound)
        b = jax.random.uniform(kb, (E,), jnp.float32, -bound, bound)
        return w, b

    wq, bq = init_linear(keys[0], keys[1])
    wk, bk = init_linear(keys[2], keys[3])
    wv, bv = init_linear(keys[4], keys[5])
    wp, bp = init_linear(keys[6], keys[7])

    params = dict(wq=wq, bq=bq, wk=wk, bk=bk, wv=wv, bv=bv, wp=wp, bp=bp)

    query = jax.random.normal(keys[8], (N, S, E), jnp.float32)
    kv_in = jax.random.normal(keys[9], (N, T, E), jnp.float32)

    # Causal mask, mask[i, j] == 0 means "do not attend".
    attn_mask = jnp.tril(jnp.ones((S, T), dtype=jnp.float32))

    out = multi_head_attention(params, query, kv_in, kv_in, attn_mask=attn_mask, num_heads=H)
    out = jax.block_until_ready(out)

    ref = reference_mha(params, query, kv_in, kv_in, attn_mask, H)
    assert out.shape == (N, S, E)
    # All compute is f32 with an exact softmax reciprocal; typically agrees to ~1e-5.
    # The 1e-3 margin only covers MXU f32 pass-decomposition / accumulation-order noise.
    assert jnp.allclose(out, ref, atol=1e-3, rtol=1e-3), "mismatch vs. pure-JAX reference"

    print("KERNEL_OK")
</pallas_src>

<mosaic_0001>
module attributes {stable_mosaic.version = 11 : i64} {
  func.func @mha_fused_kernel(%arg0: i32, %arg1: memref<48x32xf32, #tpu.memory_space<vmem>>, %arg2: memref<32x96xf32, #tpu.memory_space<vmem>>, %arg3: memref<1x96xf32, #tpu.memory_space<vmem>>, %arg4: memref<32x32xf32, #tpu.memory_space<vmem>>, %arg5: memref<1x32xf32, #tpu.memory_space<vmem>>, %arg6: memref<8x8xf32, #tpu.memory_space<vmem>>, %arg7: memref<16x32xf32, #tpu.memory_space<vmem>>, %arg8: memref<16x32xf32, #tpu.memory_space<vmem>>) attributes {dimension_semantics = [#tpu.dimension_semantics<arbitrary>], iteration_bounds = array<i64: 1>, scalar_prefetch = 0 : i64, scratch_operands = 1 : i64, tpu.core_type = #tpu.core_type<tc>, window_params = [{pipeline_mode = #tpu.pipeline_mode<synchronous>, transform_indices = @transform_0, window_bounds = array<i64: 48, 32>}, {pipeline_mode = #tpu.pipeline_mode<synchronous>, transform_indices = @transform_1, window_bounds = array<i64: 32, 96>}, {pipeline_mode = #tpu.pipeline_mode<synchronous>, transform_indices = @transform_2, window_bounds = array<i64: 1, 96>}, {pipeline_mode = #tpu.pipeline_mode<synchronous>, transform_indices = @transform_3, window_bounds = array<i64: 32, 32>}, {pipeline_mode = #tpu.pipeline_mode<synchronous>, transform_indices = @transform_4, window_bounds = array<i64: 1, 32>}, {pipeline_mode = #tpu.pipeline_mode<synchronous>, transform_indices = @transform_5, window_bounds = array<i64: 8, 8>}, {pipeline_mode = #tpu.pipeline_mode<synchronous>, transform_indices = @transform_6, window_bounds = array<i64: 16, 32>}]} {
    %c0 = arith.constant 0 : index
    %c0_0 = arith.constant 0 : index
    %0 = vector.load %arg1[%c0, %c0_0] : memref<48x32xf32, #tpu.memory_space<vmem>>, vector<48x32xf32>
    %c0_1 = arith.constant 0 : index
    %c0_2 = arith.constant 0 : index
    %1 = vector.load %arg2[%c0_1, %c0_2] : memref<32x96xf32, #tpu.memory_space<vmem>>, vector<32x96xf32>
    %cst = arith.constant dense<0.000000e+00> : vector<48x96xf32>
    %2 = tpu.matmul %0, %1, %cst {dimension_numbers = #tpu.dot_dimension_numbers<[1], [0], [0], [1], [0, 0, 1, 1], [], []>} : vector<48x32xf32>, vector<32x96xf32>, vector<48x96xf32> -> vector<48x96xf32>
    %c0_3 = arith.constant 0 : index
    %c0_4 = arith.constant 0 : index
    %3 = vector.load %arg3[%c0_3, %c0_4] : memref<1x96xf32, #tpu.memory_space<vmem>>, vector<1x96xf32>
    %4 = vector.broadcast %3 : vector<1x96xf32> to vector<48x96xf32>
    %5 = arith.addf %2, %4 : vector<48x96xf32>
    %c0_5 = arith.constant 0 : index
    %c0_6 = arith.constant 0 : index
    %6 = vector.load %arg6[%c0_5, %c0_6] : memref<8x8xf32, #tpu.memory_space<vmem>>, vector<8x8xf32>
    %7 = vector.extract_strided_slice %5 {offsets = [0, 0], sizes = [8, 16], strides = [1, 1]} : vector<48x96xf32> to vector<8x16xf32>
    %8 = vector.extract_strided_slice %5 {offsets = [16, 32], sizes = [8, 16], strides = [1, 1]} : vector<48x96xf32> to vector<8x16xf32>
    %9 = vector.extract_strided_slice %5 {offsets = [32, 64], sizes = [8, 16], strides = [1, 1]} : vector<48x96xf32> to vector<8x16xf32>
    %cst_7 = arith.constant dense<0.000000e+00> : vector<8x8xf32>
    %10 = tpu.matmul %7, %8, %cst_7 {dimension_numbers = #tpu.dot_dimension_numbers<[1], [1], [0], [0], [0, 0, 1, 0], [], []>} : vector<8x16xf32>, vector<8x16xf32>, vector<8x8xf32> -> vector<8x8xf32>
    %11 = arith.addf %10, %6 : vector<8x8xf32>
    %cst_8 = arith.constant dense<0xFF800000> : vector<8xf32>
    %12 = vector.multi_reduction <maximumf>, %11, %cst_8 [1] : vector<8x8xf32> to vector<8xf32>
    %13 = vector.shape_cast %12 : vector<8xf32> to vector<8x1xf32>
    %14 = vector.broadcast %13 : vector<8x1xf32> to vector<8x8xf32>
    %15 = arith.subf %11, %14 : vector<8x8xf32>
    %16 = math.exp %15 : vector<8x8xf32>
    %cst_9 = arith.constant dense<0.000000e+00> : vector<8xf32>
    %17 = vector.multi_reduction <add>, %16, %cst_9 [1] : vector<8x8xf32> to vector<8xf32>
    %18 = vector.shape_cast %17 : vector<8xf32> to vector<8x1xf32>
    %19 = tpu.reciprocal %18 : vector<8x1xf32> -> vector<8x1xf32>
    %20 = vector.broadcast %19 : vector<8x1xf32> to vector<8x8xf32>
    %21 = arith.mulf %16, %20 : vector<8x8xf32>
    %cst_10 = arith.constant dense<0.000000e+00> : vector<8x16xf32>
    %22 = tpu.matmul %21, %9, %cst_10 {dimension_numbers = #tpu.dot_dimension_numbers<[1], [0], [0], [1], [0, 0, 1, 1], [], []>} : vector<8x8xf32>, vector<8x16xf32>, vector<8x16xf32> -> vector<8x16xf32>
    %c0_11 = arith.constant 0 : index
    %c0_12 = arith.constant 0 : index
    %23 = vector.load %arg8[%c0_11, %c0_12] : memref<16x32xf32, #tpu.memory_space<vmem>>, vector<8x16xf32>
    tpu.vector_store %arg8[%c0_11, %c0_12], %22 {strides = array<i32>} : memref<16x32xf32, #tpu.memory_space<vmem>>, vector<8x16xf32>,
    %24 = vector.extract_strided_slice %5 {offsets = [0, 16], sizes = [8, 16], strides = [1, 1]} : vector<48x96xf32> to vector<8x16xf32>
    %25 = vector.extract_strided_slice %5 {offsets = [16, 48], sizes = [8, 16], strides = [1, 1]} : vector<48x96xf32> to vector<8x16xf32>
    %26 = vector.extract_strided_slice %5 {offsets = [32, 80], sizes = [8, 16], strides = [1, 1]} : vector<48x96xf32> to vector<8x16xf32>
    %cst_13 = arith.constant dense<0.000000e+00> : vector<8x8xf32>
    %27 = tpu.matmul %24, %25, %cst_13 {dimension_numbers = #tpu.dot_dimension_numbers<[1], [1], [0], [0], [0, 0, 1, 0], [], []>} : vector<8x16xf32>, vector<8x16xf32>, vector<8x8xf32> -> vector<8x8xf32>
    %28 = arith.addf %27, %6 : vector<8x8xf32>
    %cst_14 = arith.constant dense<0xFF800000> : vector<8xf32>
    %29 = vector.multi_reduction <maximumf>, %28, %cst_14 [1] : vector<8x8xf32> to vector<8xf32>
    %30 = vector.shape_cast %29 : vector<8xf32> to vector<8x1xf32>
    %31 = vector.broadcast %30 : vector<8x1xf32> to vector<8x8xf32>
    %32 = arith.subf %28, %31 : vector<8x8xf32>
    %33 = math.exp %32 : vector<8x8xf32>
    %cst_15 = arith.constant dense<0.000000e+00> : vector<8xf32>
    %34 = vector.multi_reduction <add>, %33, %cst_15 [1] : vector<8x8xf32> to vector<8xf32>
    %35 = vector.shape_cast %34 : vector<8xf32> to vector<8x1xf32>
    %36 = tpu.reciprocal %35 : vector<8x1xf32> -> vector<8x1xf32>
    %37 = vector.broadcast %36 : vector<8x1xf32> to vector<8x8xf32>
    %38 = arith.mulf %33, %37 : vector<8x8xf32>
    %cst_16 = arith.constant dense<0.000000e+00> : vector<8x16xf32>
    %39 = tpu.matmul %38, %26, %cst_16 {dimension_numbers = #tpu.dot_dimension_numbers<[1], [0], [0], [1], [0, 0, 1, 1], [], []>} : vector<8x8xf32>, vector<8x16xf32>, vector<8x16xf32> -> vector<8x16xf32>
    %c0_17 = arith.constant 0 : index
    %c16 = arith.constant 16 : index
    %40 = vector.load %arg8[%c0_17, %c16] : memref<16x32xf32, #tpu.memory_space<vmem>>, vector<8x16xf32>
    tpu.vector_store %arg8[%c0_17, %c16], %39 {strides = array<i32>} : memref<16x32xf32, #tpu.memory_space<vmem>>, vector<8x16xf32>,
    %41 = vector.extract_strided_slice %5 {offsets = [8, 0], sizes = [8, 16], strides = [1, 1]} : vector<48x96xf32> to vector<8x16xf32>
    %42 = vector.extract_strided_slice %5 {offsets = [24, 32], sizes = [8, 16], strides = [1, 1]} : vector<48x96xf32> to vector<8x16xf32>
    %43 = vector.extract_strided_slice %5 {offsets = [40, 64], sizes = [8, 16], strides = [1, 1]} : vector<48x96xf32> to vector<8x16xf32>
    %cst_18 = arith.constant dense<0.000000e+00> : vector<8x8xf32>
    %44 = tpu.matmul %41, %42, %cst_18 {dimension_numbers = #tpu.dot_dimension_numbers<[1], [1], [0], [0], [0, 0, 1, 0], [], []>} : vector<8x16xf32>, vector<8x16xf32>, vector<8x8xf32> -> vector<8x8xf32>
    %45 = arith.addf %44, %6 : vector<8x8xf32>
    %cst_19 = arith.constant dense<0xFF800000> : vector<8xf32>
    %46 = vector.multi_reduction <maximumf>, %45, %cst_19 [1] : vector<8x8xf32> to vector<8xf32>
    %47 = vector.shape_cast %46 : vector<8xf32> to vector<8x1xf32>
    %48 = vector.broadcast %47 : vector<8x1xf32> to vector<8x8xf32>
    %49 = arith.subf %45, %48 : vector<8x8xf32>
    %50 = math.exp %49 : vector<8x8xf32>
    %cst_20 = arith.constant dense<0.000000e+00> : vector<8xf32>
    %51 = vector.multi_reduction <add>, %50, %cst_20 [1] : vector<8x8xf32> to vector<8xf32>
    %52 = vector.shape_cast %51 : vector<8xf32> to vector<8x1xf32>
    %53 = tpu.reciprocal %52 : vector<8x1xf32> -> vector<8x1xf32>
    %54 = vector.broadcast %53 : vector<8x1xf32> to vector<8x8xf32>
    %55 = arith.mulf %50, %54 : vector<8x8xf32>
    %cst_21 = arith.constant dense<0.000000e+00> : vector<8x16xf32>
    %56 = tpu.matmul %55, %43, %cst_21 {dimension_numbers = #tpu.dot_dimension_numbers<[1], [0], [0], [1], [0, 0, 1, 1], [], []>} : vector<8x8xf32>, vector<8x16xf32>, vector<8x16xf32> -> vector<8x16xf32>
    %c8 = arith.constant 8 : index
    %c0_22 = arith.constant 0 : index
    %57 = vector.load %arg8[%c8, %c0_22] : memref<16x32xf32, #tpu.memory_space<vmem>>, vector<8x16xf32>
    tpu.vector_store %arg8[%c8, %c0_22], %56 {strides = array<i32>} : memref<16x32xf32, #tpu.memory_space<vmem>>, vector<8x16xf32>,
    %58 = vector.extract_strided_slice %5 {offsets = [8, 16], sizes = [8, 16], strides = [1, 1]} : vector<48x96xf32> to vector<8x16xf32>
    %59 = vector.extract_strided_slice %5 {offsets = [24, 48], sizes = [8, 16], strides = [1, 1]} : vector<48x96xf32> to vector<8x16xf32>
    %60 = vector.extract_strided_slice %5 {offsets = [40, 80], sizes = [8, 16], strides = [1, 1]} : vector<48x96xf32> to vector<8x16xf32>
    %cst_23 = arith.constant dense<0.000000e+00> : vector<8x8xf32>
    %61 = tpu.matmul %58, %59, %cst_23 {dimension_numbers = #tpu.dot_dimension_numbers<[1], [1], [0], [0], [0, 0, 1, 0], [], []>} : vector<8x16xf32>, vector<8x16xf32>, vector<8x8xf32> -> vector<8x8xf32>
    %62 = arith.addf %61, %6 : vector<8x8xf32>
    %cst_24 = arith.constant dense<0xFF800000> : vector<8xf32>
    %63 = vector.multi_reduction <maximumf>, %62, %cst_24 [1] : vector<8x8xf32> to vector<8xf32>
    %64 = vector.shape_cast %63 : vector<8xf32> to vector<8x1xf32>
    %65 = vector.broadcast %64 : vector<8x1xf32> to vector<8x8xf32>
    %66 = arith.subf %62, %65 : vector<8x8xf32>
    %67 = math.exp %66 : vector<8x8xf32>
    %cst_25 = arith.constant dense<0.000000e+00> : vector<8xf32>
    %68 = vector.multi_reduction <add>, %67, %cst_25 [1] : vector<8x8xf32> to vector<8xf32>
    %69 = vector.shape_cast %68 : vector<8xf32> to vector<8x1xf32>
    %70 = tpu.reciprocal %69 : vector<8x1xf32> -> vector<8x1xf32>
    %71 = vector.broadcast %70 : vector<8x1xf32> to vector<8x8xf32>
    %72 = arith.mulf %67, %71 : vector<8x8xf32>
    %cst_26 = arith.constant dense<0.000000e+00> : vector<8x16xf32>
    %73 = tpu.matmul %72, %60, %cst_26 {dimension_numbers = #tpu.dot_dimension_numbers<[1], [0], [0], [1], [0, 0, 1, 1], [], []>} : vector<8x8xf32>, vector<8x16xf32>, vector<8x16xf32> -> vector<8x16xf32>
    %c8_27 = arith.constant 8 : index
    %c16_28 = arith.constant 16 : index
    %74 = vector.load %arg8[%c8_27, %c16_28] : memref<16x32xf32, #tpu.memory_space<vmem>>, vector<8x16xf32>
    tpu.vector_store %arg8[%c8_27, %c16_28], %73 {strides = array<i32>} : memref<16x32xf32, #tpu.memory_space<vmem>>, vector<8x16xf32>,
    %c0_29 = arith.constant 0 : index
    %c0_30 = arith.constant 0 : index
    %75 = vector.load %arg8[%c0_29, %c0_30] : memref<16x32xf32, #tpu.memory_space<vmem>>, vector<16x32xf32>
    %c0_31 = arith.constant 0 : index
    %c0_32 = arith.constant 0 : index
    %76 = vector.load %arg4[%c0_31, %c0_32] : memref<32x32xf32, #tpu.memory_space<vmem>>, vector<32x32xf32>
    %cst_33 = arith.constant dense<0.000000e+00> : vector<16x32xf32>
    %77 = tpu.matmul %75, %76, %cst_33 {dimension_numbers = #tpu.dot_dimension_numbers<[1], [0], [0], [1], [0, 0, 1, 1], [], []>} : vector<16x32xf32>, vector<32x32xf32>, vector<16x32xf32> -> vector<16x32xf32>
    %c0_34 = arith.constant 0 : index
    %c0_35 = arith.constant 0 : index
    %78 = vector.load %arg5[%c0_34, %c0_35] : memref<1x32xf32, #tpu.memory_space<vmem>>, vector<1x32xf32>
    %79 = vector.broadcast %78 : vector<1x32xf32> to vector<16x32xf32>
    %80 = arith.addf %77, %79 : vector<16x32xf32>
    %c0_36 = arith.constant 0 : index
    %c0_37 = arith.constant 0 : index
    %81 = vector.load %arg7[%c0_36, %c0_37] : memref<16x32xf32, #tpu.memory_space<vmem>>, vector<16x32xf32>
    tpu.vector_store %arg7[%c0_36, %c0_37], %80 {strides = array<i32>} : memref<16x32xf32, #tpu.memory_space<vmem>>, vector<16x32xf32>,
    return
  }
  func.func @transform_0(%arg0: i32) -> (i32, i32) {
    %c0_i32 = arith.constant 0 : i32
    %c0_i32_0 = arith.constant 0 : i32
    %c0_i32_1 = arith.constant 0 : i32
    return %c0_i32, %c0_i32_0 : i32, i32
  }
  func.func @transform_1(%arg0: i32) -> (i32, i32) {
    %c0_i32 = arith.constant 0 : i32
    %c0_i32_0 = arith.constant 0 : i32
    %c0_i32_1 = arith.constant 0 : i32
    return %c0_i32, %c0_i32_0 : i32, i32
  }
  func.func @transform_2(%arg0: i32) -> (i32, i32) {
    %c0_i32 = arith.constant 0 : i32
    %c0_i32_0 = arith.constant 0 : i32
    %c0_i32_1 = arith.constant 0 : i32
    return %c0_i32, %c0_i32_0 : i32, i32
  }
  func.func @transform_3(%arg0: i32) -> (i32, i32) {
    %c0_i32 = arith.constant 0 : i32
    %c0_i32_0 = arith.constant 0 : i32
    %c0_i32_1 = arith.constant 0 : i32
    return %c0_i32, %c0_i32_0 : i32, i32
  }
  func.func @transform_4(%arg0: i32) -> (i32, i32) {
    %c0_i32 = arith.constant 0 : i32
    %c0_i32_0 = arith.constant 0 : i32
    %c0_i32_1 = arith.constant 0 : i32
    return %c0_i32, %c0_i32_0 : i32, i32
  }
  func.func @transform_5(%arg0: i32) -> (i32, i32) {
    %c0_i32 = arith.constant 0 : i32
    %c0_i32_0 = arith.constant 0 : i32
    %c0_i32_1 = arith.constant 0 : i32
    return %c0_i32, %c0_i32_0 : i32, i32
  }
  func.func @transform_6(%arg0: i32) -> (i32, i32) {
    %c0_i32 = arith.constant 0 : i32
    %c0_i32_0 = arith.constant 0 : i32
    %c0_i32_1 = arith.constant 0 : i32
    return %c0_i32, %c0_i32_0 : i32, i32
  }
}

</mosaic_0001>

<llo_original>
// kernel: tpu_custom_call.1
$region0: #{tpu_custom_call.1}
  #allocation0 [shape = 'u32[]', space=smem, size = 0x4, offset = 0x4, fixed_abs, tag = 'smem constant byte address 0x4 - core index']
  #allocation1 [shape = 'u32[144,128]{1,0:T(1,128)}', space=vmem, size = 0x12000, scoped, tag = 'internal scratch']
  #allocation2 [shape = 'f32[16,32]{1,0:T(8,128)}', space=vmem, size = 0x2000, scoped, tag = 'scratch operand']
  %s0 = inlined_call_operand.vmem [shape: f32[48,32], index: 0, kind: input, shape index: {}]
  %s1 = inlined_call_operand.vmem [shape: f32[32,96], index: 1, kind: input, shape index: {}]
  %s2 = inlined_call_operand.vmem [shape: f32[1,96], index: 2, kind: input, shape index: {}]
  %s3 = inlined_call_operand.vmem [shape: f32[32,32], index: 3, kind: input, shape index: {}]
  %s4 = inlined_call_operand.vmem [shape: f32[1,32], index: 4, kind: input, shape index: {}]
  %s5 = inlined_call_operand.vmem [shape: f32[8,8], index: 5, kind: input, shape index: {}]
  %s6 = inlined_call_operand.hbm [shape: f32[16,32], index: 6, kind: output, shape index: {}]
  %s7 = sld [smem:[#allocation0]]
  $region34: #{tpu_custom_call.1} parent=0
    _
  %s9 = ssub.s32 1, %s7
  %s10 = scalar_select 0, %s9, %s7
  $region1: #{tpu_custom_call.1} parent=0
    #allocation3 [shape = 'u8[8192]{0}', space=vmem, size = 0x2000, scoped, tag = 'output window, operand 0, single buffered']
    #allocation4 [shape = 's32[1]{0}', space=sflag, size = 0x4, scoped, tag = 'scoped memory for tpu_custom_call.1']
    %11 = vsyncpa [#allocation4], 0
    // Predicated region
    $region2: #{tpu_custom_call.1} parent=1 // pred_check
      _
    $region3: #{tpu_custom_call.1} parent=1 // pred_check_branch
      %13 = sbr.rel (0) target = $region5
    $region4: #{tpu_custom_call.1} parent=1 // pred_region
      _
    $region5: #{tpu_custom_call.1} parent=1 // pred_fallthru
      _
    // Predicated region
    $region6: #{tpu_custom_call.1} parent=1 // pred_check
      _
    $region7: #{tpu_custom_call.1} parent=1 // pred_check_branch
      %15 = sbr.rel (0) target = $region9
    $region8: #{tpu_custom_call.1} parent=1 // pred_region
      _
    $region9: #{tpu_custom_call.1} parent=1 // pred_fallthru
      _
    // Predicated region
    $region10: #{tpu_custom_call.1} parent=1 // pred_check
      _
    $region11: #{tpu_custom_call.1} parent=1 // pred_check_branch
      %17 = sbr.rel (0) target = $region13
    $region12: #{tpu_custom_call.1} parent=1 // pred_region
      _
    $region13: #{tpu_custom_call.1} parent=1 // pred_fallthru
      _
    // Predicated region
    $region14: #{tpu_custom_call.1} parent=1 // pred_check
      _
    $region15: #{tpu_custom_call.1} parent=1 // pred_check_branch
      %19 = sbr.rel (0) target = $region17
    $region16: #{tpu_custom_call.1} parent=1 // pred_region
      _
    $region17: #{tpu_custom_call.1} parent=1 // pred_fallthru
      _
    // Predicated region
    $region18: #{tpu_custom_call.1} parent=1 // pred_check
      _
    $region19: #{tpu_custom_call.1} parent=1 // pred_check_branch
      %21 = sbr.rel (0) target = $region21
    $region20: #{tpu_custom_call.1} parent=1 // pred_region
      _
    $region21: #{tpu_custom_call.1} parent=1 // pred_fallthru
      _
    // Predicated region
    $region22: #{tpu_custom_call.1} parent=1 // pred_check
      _
    $region23: #{tpu_custom_call.1} parent=1 // pred_check_branch
      %23 = sbr.rel (0) target = $region25
    $region24: #{tpu_custom_call.1} parent=1 // pred_region
      _
    $region25: #{tpu_custom_call.1} parent=1 // pred_fallthru
      _
    %v24 = vld [vmem:[%s0] sm:$0xff]
    %v25 = vld [vmem:[%s0 + $0x8] sm:$0xff]
    %v26 = vld [vmem:[%s0 + $0x10] sm:$0xff]
    %v27 = vld [vmem:[%s0 + $0x18] sm:$0xff]
    %v28 = vld [vmem:[%s0 + $0x20] sm:$0xff]
    %v29 = vld [vmem:[%s0 + $0x28] sm:$0xff]
    %v30 = vld [vmem:[%s1] sm:$0xff]
    %v31 = vld [vmem:[%s1 + $0x8] sm:$0xff]
    %v32 = vld [vmem:[%s1 + $0x10] sm:$0xff]
    %v33 = vld [vmem:[%s1 + $0x18] sm:$0xff]
    %v34 = vld [vmem:[%s2] sm:$0x1]
    %v36 = vlaneseq
    %v37 = vshrl.u32 %v36, 7
    %v38 = vsub.s32 0, %v37
    %v39 = vrot.slane %v34, %v38
    %vm41 = vcmask 261120
    %v43 = vsel %vm41, %v24, 0
    %v46 = vsel %vm41, %v25, 0
    %v49 = vsel %vm41, %v26, 0
    %v52 = vsel %vm41, %v27, 0
    %v55 = vsel %vm41, %v28, 0
    %v58 = vsel %vm41, %v29, 0
    %60 = vmatprep.subr.mxu0 0.0
    %61 = vmatpush1.msra.mxu0 %v30
    %62 = vmatprep.subr.mxu0 0.0
    %63 = vmatpush1.msra.mxu0 %v31
    %64 = vmatprep.subr.mxu0 0.0
    %65 = vmatpush1.msra.mxu0 %v32
    %66 = vmatprep.subr.mxu0 0.0
    %67 = vmatpush1.msra.mxu0 %v33
    %68 = vmatprep.subr.mxu0 0.0
    %69 = vmatpush1.msra.mxu0 0.0
    %70 = vmatprep.subr.mxu0 0.0
    %71 = vmatpush1.msra.mxu0 0.0
    %72 = vmatprep.subr.mxu0 0.0
    %73 = vmatpush1.msra.mxu0 0.0
    %74 = vmatprep.subr.mxu0 0.0
    %75 = vmatpush1.msra.mxu0 0.0
    %76 = vmatprep.subr.mxu0 0.0
    %77 = vmatpush1.msra.mxu0 0.0
    %78 = vmatprep.subr.mxu0 0.0
    %79 = vmatpush1.msra.mxu0 0.0
    %80 = vmatprep.subr.mxu0 0.0
    %81 = vmatpush1.msra.mxu0 0.0
    %82 = vmatprep.subr.mxu0 0.0
    %83 = vmatpush1.msra.mxu0 0.0
    %84 = vmatprep.subr.mxu0 0.0
    %85 = vmatpush1.msra.mxu0 0.0
    %86 = vmatprep.subr.mxu0 0.0
    %87 = vmatpush1.msra.mxu0 0.0
    %88 = vmatprep.subr.mxu0 0.0
    %89 = vmatpush1.msra.mxu0 0.0
    %90 = vmatprep.subr.mxu0 0.0
    %91 = vmatpush1.msra.mxu0 0.0
    %92 = vmatprep.subr.mxu0 0.0
    %93 = vmatpush1.msra.mxu0 0.0
    %94 = vmatprep.subr.mxu0 0.0
    %95 = vmatpush1.msra.mxu0 0.0
    %96 = vmatprep.subr.mxu0 0.0
    %97 = vmatpush1.msra.mxu0 0.0
    %98 = vmatprep.subr.mxu0 0.0
    %99 = vmatpush1.msra.mxu0 0.0
    %100 = vmatprep.subr.mxu0 0.0
    %101 = vmatpush1.msra.mxu0 0.0
    %102 = vmatprep.subr.mxu0 0.0
    %103 = vmatpush1.msra.mxu0 0.0
    %104 = vmatprep.subr.mxu0 0.0
    %105 = vmatpush1.msra.mxu0 0.0
    %106 = vmatprep.subr.mxu0 0.0
    %107 = vmatpush1.msra.mxu0 0.0
    %108 = vmatprep.subr.mxu0 0.0
    %109 = vmatpush1.msra.mxu0 0.0
    %110 = vmatprep.subr.mxu0 0.0
    %111 = vmatpush1.msra.mxu0 0.0
    %112 = vmatprep.subr.mxu0 0.0
    %113 = vmatpush1.msra.mxu0 0.0
    %114 = vmatprep.subr.mxu0 0.0
    %115 = vmatpush1.msra.mxu0 0.0
    %116 = vmatprep.subr.mxu0 0.0
    %117 = vmatpush1.msra.mxu0 0.0
    %118 = vmatprep.subr.mxu0 0.0
    %119 = vmatpush1.msra.mxu0 0.0
    %120 = vmatprep.subr.mxu0 0.0
    %121 = vmatpush1.msra.mxu0 0.0
    %122 = vmatprep.subr.mxu0 0.0
    %123 = vmatpush1.msra.mxu0 0.0
    %124 = vmatprep.mubr.f32.mxu0 0.0
    %125 = vmatmul.mubr.f32.gmra.mrb[0].mxu0 %v43
    %v126 = vpop.f32.mrb[0].mxu0
    %v127 = vadd.f32 %v39, %v126
    %v128 = vpop.f32.mrb[0].mxu0
    %129 = vmatprep.mubr.f32.mxu0 0.0
    %130 = vmatmul.mubr.f32.gmra.mrb[0].mxu0 %v46
    %v131 = vpop.f32.mrb[0].mxu0
    %v132 = vadd.f32 %v39, %v131
    %v133 = vpop.f32.mrb[0].mxu0
    %134 = vmatprep.mubr.f32.mxu0 0.0
    %135 = vmatmul.mubr.f32.gmra.mrb[0].mxu0 %v49
    %v136 = vpop.f32.mrb[0].mxu0
    %v137 = vadd.f32 %v39, %v136
    %v138 = vpop.f32.mrb[0].mxu0
    %139 = vmatprep.mubr.f32.mxu0 0.0
    %140 = vmatmul.mubr.f32.gmra.mrb[0].mxu0 %v52
    %v141 = vpop.f32.mrb[0].mxu0
    %v142 = vadd.f32 %v39, %v141
    %v143 = vpop.f32.mrb[0].mxu0
    %144 = vmatprep.mubr.f32.mxu0 0.0
    %145 = vmatmul.mubr.f32.gmra.mrb[0].mxu0 %v55
    %v146 = vpop.f32.mrb[0].mxu0
    %v147 = vadd.f32 %v39, %v146
    %v148 = vpop.f32.mrb[0].mxu0
    %149 = vmatprep.mubr.f32.mxu0 0.0
    %150 = vmatmul.mubr.f32.gmra.mrb[0].mxu0 %v58
    %v151 = vpop.f32.mrb[0].mxu0
    %v152 = vadd.f32 %v39, %v151
    %v153 = vpop.f32.mrb[0].mxu0
    %154 = vdwg.mxu0
    %v155 = vld [vmem:[%s5] sm:$0xff]
    %157 = vrot.lane.b32.xlu0 %v137, 96
    %v158 = vpop.permute.xlu0 %157
    %vm159 = vcmask 130048
    %v161 = vsel %vm159, %v127, 0
    %v163 = vsel %vm159, %v158, 0
    %165 = vmatprep.subr.mxu0 0.0
    %166 = vmatpush1.xpose.msra.mxu0 %v163
    %167 = vmatprep.subr.mxu0 0.0
    %168 = vmatpush1.xpose.msra.mxu0 0.0
    %169 = vmatprep.subr.mxu0 0.0
    %170 = vmatpush1.xpose.msra.mxu0 0.0
    %171 = vmatprep.subr.mxu0 0.0
    %172 = vmatpush1.xpose.msra.mxu0 0.0
    %173 = vmatprep.subr.mxu0 0.0
    %174 = vmatpush1.xpose.msra.mxu0 0.0
    %175 = vmatprep.subr.mxu0 0.0
    %176 = vmatpush1.xpose.msra.mxu0 0.0
    %177 = vmatprep.subr.mxu0 0.0
    %178 = vmatpush1.xpose.msra.mxu0 0.0
    %179 = vmatprep.subr.mxu0 0.0
    %180 = vmatpush1.xpose.msra.mxu0 0.0
    %181 = vmatprep.subr.mxu0 0.0
    %182 = vmatpush1.xpose.msra.mxu0 0.0
    %183 = vmatprep.subr.mxu0 0.0
    %184 = vmatpush1.xpose.msra.mxu0 0.0
    %185 = vmatprep.subr.mxu0 0.0
    %186 = vmatpush1.xpose.msra.mxu0 0.0
    %187 = vmatprep.subr.mxu0 0.0
    %188 = vmatpush1.xpose.msra.mxu0 0.0
    %189 = vmatprep.subr.mxu0 0.0
    %190 = vmatpush1.xpose.msra.mxu0 0.0
    %191 = vmatprep.subr.mxu0 0.0
    %192 = vmatpush1.xpose.msra.mxu0 0.0
    %193 = vmatprep.subr.mxu0 0.0
    %194 = vmatpush1.xpose.msra.mxu0 0.0
    %195 = vmatprep.subr.mxu0 0.0
    %196 = vmatpush1.xpose.msra.mxu0 0.0
    %197 = vmatprep.subr.mxu0 0.0
    %198 = vmatpush1.xpose.msra.mxu0 0.0
    %199 = vmatprep.subr.mxu0 0.0
    %200 = vmatpush1.xpose.msra.mxu0 0.0
    %201 = vmatprep.subr.mxu0 0.0
    %202 = vmatpush1.xpose.msra.mxu0 0.0
    %203 = vmatprep.subr.mxu0 0.0
    %204 = vmatpush1.xpose.msra.mxu0 0.0
    %205 = vmatprep.subr.mxu0 0.0
    %206 = vmatpush1.xpose.msra.mxu0 0.0
    %207 = vmatprep.subr.mxu0 0.0
    %208 = vmatpush1.xpose.msra.mxu0 0.0
    %209 = vmatprep.subr.mxu0 0.0
    %210 = vmatpush1.xpose.msra.mxu0 0.0
    %211 = vmatprep.subr.mxu0 0.0
    %212 = vmatpush1.xpose.msra.mxu0 0.0
    %213 = vmatprep.subr.mxu0 0.0
    %214 = vmatpush1.xpose.msra.mxu0 0.0
    %215 = vmatprep.subr.mxu0 0.0
    %216 = vmatpush1.xpose.msra.mxu0 0.0
    %217 = vmatprep.subr.mxu0 0.0
    %218 = vmatpush1.xpose.msra.mxu0 0.0
    %219 = vmatprep.subr.mxu0 0.0
    %220 = vmatpush1.xpose.msra.mxu0 0.0
    %221 = vmatprep.subr.mxu0 0.0
    %222 = vmatpush1.xpose.msra.mxu0 0.0
    %223 = vmatprep.subr.mxu0 0.0
    %224 = vmatpush1.xpose.msra.mxu0 0.0
    %225 = vmatprep.subr.mxu0 0.0
    %226 = vmatpush1.xpose.msra.mxu0 0.0
    %227 = vmatprep.subr.mxu0 0.0
    %228 = vmatpush1.xpose.msra.mxu0 0.0
    %229 = vmatprep.mubr.f32.mxu0 0.0
    %230 = vmatmul.mubr.f32.gmra.mrb[0].mxu0 %v161
    %v231 = vpop.f32.mrb[0].mxu0
    %v232 = vadd.f32 %v155, %v231
    %v233 = vpop.f32.mrb[0].mxu0
    %234 = vdwg.mxu0
    %vm235 = vcmask 64512
    %v236 = vsel %vm235, %v232, -inf
    %237 = vmax.xlane.f32.xlu0 %v236
    %v238 = vpop.xlane.xlu0 %237
    %v239 = vsub.f32 %v232, %v238
    %v240 = vmul.f32 %v239, 1.442695
    %v241 = vpow.pop %v240
    %v242 = vsel %vm235, %v241, 0.0
    %243 = vadd.xlane.f32.xlu0 %v242
    %v244 = vpop.xlane.xlu0 %243
    %v245 = vrcp.pop %v244
    %v246 = vmul.f32 %v241, %v245
    %248 = vrot.lane.b32.xlu0 %v147, 64
    %v249 = vpop.permute.xlu0 %248
    %v252 = vsel %vm235, %v246, 0
    %254 = vmatprep.subr.mxu0 0.0
    %255 = vmatpush1.msra.mxu0 %v249
    %256 = vmatprep.subr.mxu0 0.0
    %257 = vmatpush1.msra.mxu0 0.0
    %258 = vmatprep.subr.mxu0 0.0
    %259 = vmatpush1.msra.mxu0 0.0
    %260 = vmatprep.subr.mxu0 0.0
    %261 = vmatpush1.msra.mxu0 0.0
    %262 = vmatprep.subr.mxu0 0.0
    %263 = vmatpush1.msra.mxu0 0.0
    %264 = vmatprep.subr.mxu0 0.0
    %265 = vmatpush1.msra.mxu0 0.0
    %266 = vmatprep.subr.mxu0 0.0
    %267 = vmatpush1.msra.mxu0 0.0
    %268 = vmatprep.subr.mxu0 0.0
    %269 = vmatpush1.msra.mxu0 0.0
    %270 = vmatprep.subr.mxu0 0.0
    %271 = vmatpush1.msra.mxu0 0.0
    %272 = vmatprep.subr.mxu0 0.0
    %273 = vmatpush1.msra.mxu0 0.0
    %274 = vmatprep.subr.mxu0 0.0
    %275 = vmatpush1.msra.mxu0 0.0
    %276 = vmatprep.subr.mxu0 0.0
    %277 = vmatpush1.msra.mxu0 0.0
    %278 = vmatprep.subr.mxu0 0.0
    %279 = vmatpush1.msra.mxu0 0.0
    %280 = vmatprep.subr.mxu0 0.0
    %281 = vmatpush1.msra.mxu0 0.0
    %282 = vmatprep.subr.mxu0 0.0
    %283 = vmatpush1.msra.mxu0 0.0
    %284 = vmatprep.subr.mxu0 0.0
    %285 = vmatpush1.msra.mxu0 0.0
    %286 = vmatprep.subr.mxu0 0.0
    %287 = vmatpush1.msra.mxu0 0.0
    %288 = vmatprep.subr.mxu0 0.0
    %289 = vmatpush1.msra.mxu0 0.0
    %290 = vmatprep.subr.mxu0 0.0
    %291 = vmatpush1.msra.mxu0 0.0
    %292 = vmatprep.subr.mxu0 0.0
    %293 = vmatpush1.msra.mxu0 0.0
    %294 = vmatprep.subr.mxu0 0.0
    %295 = vmatpush1.msra.mxu0 0.0
    %296 = vmatprep.subr.mxu0 0.0
    %297 = vmatpush1.msra.mxu0 0.0
    %298 = vmatprep.subr.mxu0 0.0
    %299 = vmatpush1.msra.mxu0 0.0
    %300 = vmatprep.subr.mxu0 0.0
    %301 = vmatpush1.msra.mxu0 0.0
    %302 = vmatprep.subr.mxu0 0.0
    %303 = vmatpush1.msra.mxu0 0.0
    %304 = vmatprep.subr.mxu0 0.0
    %305 = vmatpush1.msra.mxu0 0.0
    %306 = vmatprep.subr.mxu0 0.0
    %307 = vmatpush1.msra.mxu0 0.0
    %308 = vmatprep.subr.mxu0 0.0
    %309 = vmatpush1.msra.mxu0 0.0
    %310 = vmatprep.subr.mxu0 0.0
    %311 = vmatpush1.msra.mxu0 0.0
    %312 = vmatprep.subr.mxu0 0.0
    %313 = vmatpush1.msra.mxu0 0.0
    %314 = vmatprep.subr.mxu0 0.0
    %315 = vmatpush1.msra.mxu0 0.0
    %316 = vmatprep.subr.mxu0 0.0
    %317 = vmatpush1.msra.mxu0 0.0
    %318 = vmatprep.mubr.f32.mxu0 0.0
    %319 = vmatmul.mubr.f32.gmra.mrb[0].mxu0 %v252
    %v320 = vpop.f32.mrb[0].mxu0
    %v321 = vadd.f32 0.0, %v320
    %v322 = vpop.f32.mrb[0].mxu0
    %323 = vdwg.mxu0
    %324 = vst.msk [vmem:[#allocation2] sm:$0xff] %vm159, %v321
    %325 = vrot.lane.b32.xlu0 %v127, 112
    %v326 = vpop.permute.xlu0 %325
    %327 = vrot.lane.b32.xlu0 %v137, 80
    %v328 = vpop.permute.xlu0 %327
    %v329 = vsel %vm159, %v326, 0
    %v331 = vsel %vm159, %v328, 0
    %333 = vmatprep.subr.mxu0 0.0
    %334 = vmatpush1.xpose.msra.mxu0 %v331
    %335 = vmatprep.subr.mxu0 0.0
    %336 = vmatpush1.xpose.msra.mxu0 0.0
    %337 = vmatprep.subr.mxu0 0.0
    %338 = vmatpush1.xpose.msra.mxu0 0.0
    %339 = vmatprep.subr.mxu0 0.0
    %340 = vmatpush1.xpose.msra.mxu0 0.0
    %341 = vmatprep.subr.mxu0 0.0
    %342 = vmatpush1.xpose.msra.mxu0 0.0
    %343 = vmatprep.subr.mxu0 0.0
    %344 = vmatpush1.xpose.msra.mxu0 0.0
    %345 = vmatprep.subr.mxu0 0.0
    %346 = vmatpush1.xpose.msra.mxu0 0.0
    %347 = vmatprep.subr.mxu0 0.0
    %348 = vmatpush1.xpose.msra.mxu0 0.0
    %349 = vmatprep.subr.mxu0 0.0
    %350 = vmatpush1.xpose.msra.mxu0 0.0
    %351 = vmatprep.subr.mxu0 0.0
    %352 = vmatpush1.xpose.msra.mxu0 0.0
    %353 = vmatprep.subr.mxu0 0.0
    %354 = vmatpush1.xpose.msra.mxu0 0.0
    %355 = vmatprep.subr.mxu0 0.0
    %356 = vmatpush1.xpose.msra.mxu0 0.0
    %357 = vmatprep.subr.mxu0 0.0
    %358 = vmatpush1.xpose.msra.mxu0 0.0
    %359 = vmatprep.subr.mxu0 0.0
    %360 = vmatpush1.xpose.msra.mxu0 0.0
    %361 = vmatprep.subr.mxu0 0.0
    %362 = vmatpush1.xpose.msra.mxu0 0.0
    %363 = vmatprep.subr.mxu0 0.0
    %364 = vmatpush1.xpose.msra.mxu0 0.0
    %365 = vmatprep.subr.mxu0 0.0
    %366 = vmatpush1.xpose.msra.mxu0 0.0
    %367 = vmatprep.subr.mxu0 0.0
    %368 = vmatpush1.xpose.msra.mxu0 0.0
    %369 = vmatprep.subr.mxu0 0.0
    %370 = vmatpush1.xpose.msra.mxu0 0.0
    %371 = vmatprep.subr.mxu0 0.0
    %372 = vmatpush1.xpose.msra.mxu0 0.0
    %373 = vmatprep.subr.mxu0 0.0
    %374 = vmatpush1.xpose.msra.mxu0 0.0
    %375 = vmatprep.subr.mxu0 0.0
    %376 = vmatpush1.xpose.msra.mxu0 0.0
    %377 = vmatprep.subr.mxu0 0.0
    %378 = vmatpush1.xpose.msra.mxu0 0.0
    %379 = vmatprep.subr.mxu0 0.0
    %380 = vmatpush1.xpose.msra.mxu0 0.0
    %381 = vmatprep.subr.mxu0 0.0
    %382 = vmatpush1.xpose.msra.mxu0 0.0
    %383 = vmatprep.subr.mxu0 0.0
    %384 = vmatpush1.xpose.msra.mxu0 0.0
    %385 = vmatprep.subr.mxu0 0.0
    %386 = vmatpush1.xpose.msra.mxu0 0.0
    %387 = vmatprep.subr.mxu0 0.0
    %388 = vmatpush1.xpose.msra.mxu0 0.0
    %389 = vmatprep.subr.mxu0 0.0
    %390 = vmatpush1.xpose.msra.mxu0 0.0
    %391 = vmatprep.subr.mxu0 0.0
    %392 = vmatpush1.xpose.msra.mxu0 0.0
    %393 = vmatprep.subr.mxu0 0.0
    %394 = vmatpush1.xpose.msra.mxu0 0.0
    %395 = vmatprep.subr.mxu0 0.0
    %396 = vmatpush1.xpose.msra.mxu0 0.0
    %397 = vmatprep.mubr.f32.mxu0 0.0
    %398 = vmatmul.mubr.f32.gmra.mrb[0].mxu0 %v329
    %v399 = vpop.f32.mrb[0].mxu0
    %v400 = vadd.f32 %v155, %v399
    %v401 = vpop.f32.mrb[0].mxu0
    %402 = vdwg.mxu0
    %v403 = vsel %vm235, %v400, -inf
    %404 = vmax.xlane.f32.xlu0 %v403
    %v405 = vpop.xlane.xlu0 %404
    %v406 = vsub.f32 %v400, %v405
    %v407 = vmul.f32 %v406, 1.442695
    %v408 = vpow.pop %v407
    %v409 = vsel %vm235, %v408, 0.0
    %410 = vadd.xlane.f32.xlu0 %v409
    %v411 = vpop.xlane.xlu0 %410
    %v412 = vrcp.pop %v411
    %v413 = vmul.f32 %v408, %v412
    %414 = vrot.lane.b32.xlu0 %v147, 48
    %v415 = vpop.permute.xlu0 %414
    %v418 = vsel %vm235, %v413, 0
    %420 = vmatprep.subr.mxu0 0.0
    %421 = vmatpush1.msra.mxu0 %v415
    %422 = vmatprep.subr.mxu0 0.0
    %423 = vmatpush1.msra.mxu0 0.0
    %424 = vmatprep.subr.mxu0 0.0
    %425 = vmatpush1.msra.mxu0 0.0
    %426 = vmatprep.subr.mxu0 0.0
    %427 = vmatpush1.msra.mxu0 0.0
    %428 = vmatprep.subr.mxu0 0.0
    %429 = vmatpush1.msra.mxu0 0.0
    %430 = vmatprep.subr.mxu0 0.0
    %431 = vmatpush1.msra.mxu0 0.0
    %432 = vmatprep.subr.mxu0 0.0
    %433 = vmatpush1.msra.mxu0 0.0
    %434 = vmatprep.subr.mxu0 0.0
    %435 = vmatpush1.msra.mxu0 0.0
    %436 = vmatprep.subr.mxu0 0.0
    %437 = vmatpush1.msra.mxu0 0.0
    %438 = vmatprep.subr.mxu0 0.0
    %439 = vmatpush1.msra.mxu0 0.0
    %440 = vmatprep.subr.mxu0 0.0
    %441 = vmatpush1.msra.mxu0 0.0
    %442 = vmatprep.subr.mxu0 0.0
    %443 = vmatpush1.msra.mxu0 0.0
    %444 = vmatprep.subr.mxu0 0.0
    %445 = vmatpush1.msra.mxu0 0.0
    %446 = vmatprep.subr.mxu0 0.0
    %447 = vmatpush1.msra.mxu0 0.0
    %448 = vmatprep.subr.mxu0 0.0
    %449 = vmatpush1.msra.mxu0 0.0
    %450 = vmatprep.subr.mxu0 0.0
    %451 = vmatpush1.msra.mxu0 0.0
    %452 = vmatprep.subr.mxu0 0.0
    %453 = vmatpush1.msra.mxu0 0.0
    %454 = vmatprep.subr.mxu0 0.0
    %455 = vmatpush1.msra.mxu0 0.0
    %456 = vmatprep.subr.mxu0 0.0
    %457 = vmatpush1.msra.mxu0 0.0
    %458 = vmatprep.subr.mxu0 0.0
    %459 = vmatpush1.msra.mxu0 0.0
    %460 = vmatprep.subr.mxu0 0.0
    %461 = vmatpush1.msra.mxu0 0.0
    %462 = vmatprep.subr.mxu0 0.0
    %463 = vmatpush1.msra.mxu0 0.0
    %464 = vmatprep.subr.mxu0 0.0
    %465 = vmatpush1.msra.mxu0 0.0
    %466 = vmatprep.subr.mxu0 0.0
    %467 = vmatpush1.msra.mxu0 0.0
    %468 = vmatprep.subr.mxu0 0.0
    %469 = vmatpush1.msra.mxu0 0.0
    %470 = vmatprep.subr.mxu0 0.0
    %471 = vmatpush1.msra.mxu0 0.0
    %472 = vmatprep.subr.mxu0 0.0
    %473 = vmatpush1.msra.mxu0 0.0
    %474 = vmatprep.subr.mxu0 0.0
    %475 = vmatpush1.msra.mxu0 0.0
    %476 = vmatprep.subr.mxu0 0.0
    %477 = vmatpush1.msra.mxu0 0.0
    %478 = vmatprep.subr.mxu0 0.0
    %479 = vmatpush1.msra.mxu0 0.0
    %480 = vmatprep.subr.mxu0 0.0
    %481 = vmatpush1.msra.mxu0 0.0
    %482 = vmatprep.subr.mxu0 0.0
    %483 = vmatpush1.msra.mxu0 0.0
    %484 = vmatprep.mubr.f32.mxu0 0.0
    %485 = vmatmul.mubr.f32.gmra.mrb[0].mxu0 %v418
    %v486 = vpop.f32.mrb[0].mxu0
    %v487 = vadd.f32 0.0, %v486
    %v488 = vpop.f32.mrb[0].mxu0
    %489 = vdwg.mxu0
    %491 = vrot.lane.b32.xlu0 %v487, 16
    %v492 = vpop.permute.xlu0 %491
    %vm494 = vcmask 261248
    %495 = vst.msk [vmem:[#allocation2] sm:$0xff] %vm494, %v492
    %497 = vrot.lane.b32.xlu0 %v142, 96
    %v498 = vpop.permute.xlu0 %497
    %v500 = vsel %vm159, %v132, 0
    %v502 = vsel %vm159, %v498, 0
    %504 = vmatprep.subr.mxu0 0.0
    %505 = vmatpush1.xpose.msra.mxu0 %v502
    %506 = vmatprep.subr.mxu0 0.0
    %507 = vmatpush1.xpose.msra.mxu0 0.0
    %508 = vmatprep.subr.mxu0 0.0
    %509 = vmatpush1.xpose.msra.mxu0 0.0
    %510 = vmatprep.subr.mxu0 0.0
    %511 = vmatpush1.xpose.msra.mxu0 0.0
    %512 = vmatprep.subr.mxu0 0.0
    %513 = vmatpush1.xpose.msra.mxu0 0.0
    %514 = vmatprep.subr.mxu0 0.0
    %515 = vmatpush1.xpose.msra.mxu0 0.0
    %516 = vmatprep.subr.mxu0 0.0
    %517 = vmatpush1.xpose.msra.mxu0 0.0
    %518 = vmatprep.subr.mxu0 0.0
    %519 = vmatpush1.xpose.msra.mxu0 0.0
    %520 = vmatprep.subr.mxu0 0.0
    %521 = vmatpush1.xpose.msra.mxu0 0.0
    %522 = vmatprep.subr.mxu0 0.0
    %523 = vmatpush1.xpose.msra.mxu0 0.0
    %524 = vmatprep.subr.mxu0 0.0
    %525 = vmatpush1.xpose.msra.mxu0 0.0
    %526 = vmatprep.subr.mxu0 0.0
    %527 = vmatpush1.xpose.msra.mxu0 0.0
    %528 = vmatprep.subr.mxu0 0.0
    %529 = vmatpush1.xpose.msra.mxu0 0.0
    %530 = vmatprep.subr.mxu0 0.0
    %531 = vmatpush1.xpose.msra.mxu0 0.0
    %532 = vmatprep.subr.mxu0 0.0
    %533 = vmatpush1.xpose.msra.mxu0 0.0
    %534 = vmatprep.subr.mxu0 0.0
    %535 = vmatpush1.xpose.msra.mxu0 0.0
    %536 = vmatprep.subr.mxu0 0.0
    %537 = vmatpush1.xpose.msra.mxu0 0.0
    %538 = vmatprep.subr.mxu0 0.0
    %539 = vmatpush1.xpose.msra.mxu0 0.0
    %540 = vmatprep.subr.mxu0 0.0
    %541 = vmatpush1.xpose.msra.mxu0 0.0
    %542 = vmatprep.subr.mxu0 0.0
    %543 = vmatpush1.xpose.msra.mxu0 0.0
    %544 = vmatprep.subr.mxu0 0.0
    %545 = vmatpush1.xpose.msra.mxu0 0.0
    %546 = vmatprep.subr.mxu0 0.0
    %547 = vmatpush1.xpose.msra.mxu0 0.0
    %548 = vmatprep.subr.mxu0 0.0
    %549 = vmatpush1.xpose.msra.mxu0 0.0
    %550 = vmatprep.subr.mxu0 0.0
    %551 = vmatpush1.xpose.msra.mxu0 0.0
    %552 = vmatprep.subr.mxu0 0.0
    %553 = vmatpush1.xpose.msra.mxu0 0.0
    %554 = vmatprep.subr.mxu0 0.0
    %555 = vmatpush1.xpose.msra.mxu0 0.0
    %556 = vmatprep.subr.mxu0 0.0
    %557 = vmatpush1.xpose.msra.mxu0 0.0
    %558 = vmatprep.subr.mxu0 0.0
    %559 = vmatpush1.xpose.msra.mxu0 0.0
    %560 = vmatprep.subr.mxu0 0.0
    %561 = vmatpush1.xpose.msra.mxu0 0.0
    %562 = vmatprep.subr.mxu0 0.0
    %563 = vmatpush1.xpose.msra.mxu0 0.0
    %564 = vmatprep.subr.mxu0 0.0
    %565 = vmatpush1.xpose.msra.mxu0 0.0
    %566 = vmatprep.subr.mxu0 0.0
    %567 = vmatpush1.xpose.msra.mxu0 0.0
    %568 = vmatprep.mubr.f32.mxu0 0.0
    %569 = vmatmul.mubr.f32.gmra.mrb[0].mxu0 %v500
    %v570 = vpop.f32.mrb[0].mxu0
    %v571 = vadd.f32 %v155, %v570
    %v572 = vpop.f32.mrb[0].mxu0
    %573 = vdwg.mxu0
    %v574 = vsel %vm235, %v571, -inf
    %575 = vmax.xlane.f32.xlu0 %v574
    %v576 = vpop.xlane.xlu0 %575
    %v577 = vsub.f32 %v571, %v576
    %v578 = vmul.f32 %v577, 1.442695
    %v579 = vpow.pop %v578
    %v580 = vsel %vm235, %v579, 0.0
    %581 = vadd.xlane.f32.xlu0 %v580
    %v582 = vpop.xlane.xlu0 %581
    %v583 = vrcp.pop %v582
    %v584 = vmul.f32 %v579, %v583
    %586 = vrot.lane.b32.xlu0 %v152, 64
    %v587 = vpop.permute.xlu0 %586
    %v590 = vsel %vm235, %v584, 0
    %592 = vmatprep.subr.mxu0 0.0
    %593 = vmatpush1.msra.mxu0 %v587
    %594 = vmatprep.subr.mxu0 0.0
    %595 = vmatpush1.msra.mxu0 0.0
    %596 = vmatprep.subr.mxu0 0.0
    %597 = vmatpush1.msra.mxu0 0.0
    %598 = vmatprep.subr.mxu0 0.0
    %599 = vmatpush1.msra.mxu0 0.0
    %600 = vmatprep.subr.mxu0 0.0
    %601 = vmatpush1.msra.mxu0 0.0
    %602 = vmatprep.subr.mxu0 0.0
    %603 = vmatpush1.msra.mxu0 0.0
    %604 = vmatprep.subr.mxu0 0.0
    %605 = vmatpush1.msra.mxu0 0.0
    %606 = vmatprep.subr.mxu0 0.0
    %607 = vmatpush1.msra.mxu0 0.0
    %608 = vmatprep.subr.mxu0 0.0
    %609 = vmatpush1.msra.mxu0 0.0
    %610 = vmatprep.subr.mxu0 0.0
    %611 = vmatpush1.msra.mxu0 0.0
    %612 = vmatprep.subr.mxu0 0.0
    %613 = vmatpush1.msra.mxu0 0.0
    %614 = vmatprep.subr.mxu0 0.0
    %615 = vmatpush1.msra.mxu0 0.0
    %616 = vmatprep.subr.mxu0 0.0
    %617 = vmatpush1.msra.mxu0 0.0
    %618 = vmatprep.subr.mxu0 0.0
    %619 = vmatpush1.msra.mxu0 0.0
    %620 = vmatprep.subr.mxu0 0.0
    %621 = vmatpush1.msra.mxu0 0.0
    %622 = vmatprep.subr.mxu0 0.0
    %623 = vmatpush1.msra.mxu0 0.0
    %624 = vmatprep.subr.mxu0 0.0
    %625 = vmatpush1.msra.mxu0 0.0
    %626 = vmatprep.subr.mxu0 0.0
    %627 = vmatpush1.msra.mxu0 0.0
    %628 = vmatprep.subr.mxu0 0.0
    %629 = vmatpush1.msra.mxu0 0.0
    %630 = vmatprep.subr.mxu0 0.0
    %631 = vmatpush1.msra.mxu0 0.0
    %632 = vmatprep.subr.mxu0 0.0
    %633 = vmatpush1.msra.mxu0 0.0
    %634 = vmatprep.subr.mxu0 0.0
    %635 = vmatpush1.msra.mxu0 0.0
    %636 = vmatprep.subr.mxu0 0.0
    %637 = vmatpush1.msra.mxu0 0.0
    %638 = vmatprep.subr.mxu0 0.0
    %639 = vmatpush1.msra.mxu0 0.0
    %640 = vmatprep.subr.mxu0 0.0
    %641 = vmatpush1.msra.mxu0 0.0
    %642 = vmatprep.subr.mxu0 0.0
    %643 = vmatpush1.msra.mxu0 0.0
    %644 = vmatprep.subr.mxu0 0.0
    %645 = vmatpush1.msra.mxu0 0.0
    %646 = vmatprep.subr.mxu0 0.0
    %647 = vmatpush1.msra.mxu0 0.0
    %648 = vmatprep.subr.mxu0 0.0
    %649 = vmatpush1.msra.mxu0 0.0
    %650 = vmatprep.subr.mxu0 0.0
    %651 = vmatpush1.msra.mxu0 0.0
    %652 = vmatprep.subr.mxu0 0.0
    %653 = vmatpush1.msra.mxu0 0.0
    %654 = vmatprep.subr.mxu0 0.0
    %655 = vmatpush1.msra.mxu0 0.0
    %656 = vmatprep.mubr.f32.mxu0 0.0
    %657 = vmatmul.mubr.f32.gmra.mrb[0].mxu0 %v590
    %v658 = vpop.f32.mrb[0].mxu0
    %v659 = vadd.f32 0.0, %v658
    %v660 = vpop.f32.mrb[0].mxu0
    %661 = vdwg.mxu0
    %662 = vst.msk [vmem:[#allocation2 + $0x8] sm:$0xff] %vm159, %v659
    %663 = vrot.lane.b32.xlu0 %v132, 112
    %v664 = vpop.permute.xlu0 %663
    %665 = vrot.lane.b32.xlu0 %v142, 80
    %v666 = vpop.permute.xlu0 %665
    %v667 = vsel %vm159, %v664, 0
    %v669 = vsel %vm159, %v666, 0
    %671 = vmatprep.subr.mxu0 0.0
    %672 = vmatpush1.xpose.msra.mxu0 %v669
    %673 = vmatprep.subr.mxu0 0.0
    %674 = vmatpush1.xpose.msra.mxu0 0.0
    %675 = vmatprep.subr.mxu0 0.0
    %676 = vmatpush1.xpose.msra.mxu0 0.0
    %677 = vmatprep.subr.mxu0 0.0
    %678 = vmatpush1.xpose.msra.mxu0 0.0
    %679 = vmatprep.subr.mxu0 0.0
    %680 = vmatpush1.xpose.msra.mxu0 0.0
    %681 = vmatprep.subr.mxu0 0.0
    %682 = vmatpush1.xpose.msra.mxu0 0.0
    %683 = vmatprep.subr.mxu0 0.0
    %684 = vmatpush1.xpose.msra.mxu0 0.0
    %685 = vmatprep.subr.mxu0 0.0
    %686 = vmatpush1.xpose.msra.mxu0 0.0
    %687 = vmatprep.subr.mxu0 0.0
    %688 = vmatpush1.xpose.msra.mxu0 0.0
    %689 = vmatprep.subr.mxu0 0.0
    %690 = vmatpush1.xpose.msra.mxu0 0.0
    %691 = vmatprep.subr.mxu0 0.0
    %692 = vmatpush1.xpose.msra.mxu0 0.0
    %693 = vmatprep.subr.mxu0 0.0
    %694 = vmatpush1.xpose.msra.mxu0 0.0
    %695 = vmatprep.subr.mxu0 0.0
    %696 = vmatpush1.xpose.msra.mxu0 0.0
    %697 = vmatprep.subr.mxu0 0.0
    %698 = vmatpush1.xpose.msra.mxu0 0.0
    %699 = vmatprep.subr.mxu0 0.0
    %700 = vmatpush1.xpose.msra.mxu0 0.0
    %701 = vmatprep.subr.mxu0 0.0
    %702 = vmatpush1.xpose.msra.mxu0 0.0
    %703 = vmatprep.subr.mxu0 0.0
    %704 = vmatpush1.xpose.msra.mxu0 0.0
    %705 = vmatprep.subr.mxu0 0.0
    %706 = vmatpush1.xpose.msra.mxu0 0.0
    %707 = vmatprep.subr.mxu0 0.0
    %708 = vmatpush1.xpose.msra.mxu0 0.0
    %709 = vmatprep.subr.mxu0 0.0
    %710 = vmatpush1.xpose.msra.mxu0 0.0
    %711 = vmatprep.subr.mxu0 0.0
    %712 = vmatpush1.xpose.msra.mxu0 0.0
    %713 = vmatprep.subr.mxu0 0.0
    %714 = vmatpush1.xpose.msra.mxu0 0.0
    %715 = vmatprep.subr.mxu0 0.0
    %716 = vmatpush1.xpose.msra.mxu0 0.0
    %717 = vmatprep.subr.mxu0 0.0
    %718 = vmatpush1.xpose.msra.mxu0 0.0
    %719 = vmatprep.subr.mxu0 0.0
    %720 = vmatpush1.xpose.msra.mxu0 0.0
    %721 = vmatprep.subr.mxu0 0.0
    %722 = vmatpush1.xpose.msra.mxu0 0.0
    %723 = vmatprep.subr.mxu0 0.0
    %724 = vmatpush1.xpose.msra.mxu0 0.0
    %725 = vmatprep.subr.mxu0 0.0
    %726 = vmatpush1.xpose.msra.mxu0 0.0
    %727 = vmatprep.subr.mxu0 0.0
    %728 = vmatpush1.xpose.msra.mxu0 0.0
    %729 = vmatprep.subr.mxu0 0.0
    %730 = vmatpush1.xpose.msra.mxu0 0.0
    %731 = vmatprep.subr.mxu0 0.0
    %732 = vmatpush1.xpose.msra.mxu0 0.0
    %733 = vmatprep.subr.mxu0 0.0
    %734 = vmatpush1.xpose.msra.mxu0 0.0
    %735 = vmatprep.mubr.f32.mxu0 0.0
    %736 = vmatmul.mubr.f32.gmra.mrb[0].mxu0 %v667
    %v737 = vpop.f32.mrb[0].mxu0
    %v738 = vadd.f32 %v155, %v737
    %v739 = vpop.f32.mrb[0].mxu0
    %740 = vdwg.mxu0
    %v741 = vsel %vm235, %v738, -inf
    %742 = vmax.xlane.f32.xlu0 %v741
    %v743 = vpop.xlane.xlu0 %742
    %v744 = vsub.f32 %v738, %v743
    %v745 = vmul.f32 %v744, 1.442695
    %v746 = vpow.pop %v745
    %v747 = vsel %vm235, %v746, 0.0
    %748 = vadd.xlane.f32.xlu0 %v747
    %v749 = vpop.xlane.xlu0 %748
    %v750 = vrcp.pop %v749
    %v751 = vmul.f32 %v746, %v750
    %752 = vrot.lane.b32.xlu0 %v152, 48
    %v753 = vpop.permute.xlu0 %752
    %v756 = vsel %vm235, %v751, 0
    %758 = vmatprep.subr.mxu0 0.0
    %759 = vmatpush1.msra.mxu0 %v753
    %760 = vmatprep.subr.mxu0 0.0
    %761 = vmatpush1.msra.mxu0 0.0
    %762 = vmatprep.subr.mxu0 0.0
    %763 = vmatpush1.msra.mxu0 0.0
    %764 = vmatprep.subr.mxu0 0.0
    %765 = vmatpush1.msra.mxu0 0.0
    %766 = vmatprep.subr.mxu0 0.0
    %767 = vmatpush1.msra.mxu0 0.0
    %768 = vmatprep.subr.mxu0 0.0
    %769 = vmatpush1.msra.mxu0 0.0
    %770 = vmatprep.subr.mxu0 0.0
    %771 = vmatpush1.msra.mxu0 0.0
    %772 = vmatprep.subr.mxu0 0.0
    %773 = vmatpush1.msra.mxu0 0.0
    %774 = vmatprep.subr.mxu0 0.0
    %775 = vmatpush1.msra.mxu0 0.0
    %776 = vmatprep.subr.mxu0 0.0
    %777 = vmatpush1.msra.mxu0 0.0
    %778 = vmatprep.subr.mxu0 0.0
    %779 = vmatpush1.msra.mxu0 0.0
    %780 = vmatprep.subr.mxu0 0.0
    %781 = vmatpush1.msra.mxu0 0.0
    %782 = vmatprep.subr.mxu0 0.0
    %783 = vmatpush1.msra.mxu0 0.0
    %784 = vmatprep.subr.mxu0 0.0
    %785 = vmatpush1.msra.mxu0 0.0
    %786 = vmatprep.subr.mxu0 0.0
    %787 = vmatpush1.msra.mxu0 0.0
    %788 = vmatprep.subr.mxu0 0.0
    %789 = vmatpush1.msra.mxu0 0.0
    %790 = vmatprep.subr.mxu0 0.0
    %791 = vmatpush1.msra.mxu0 0.0
    %792 = vmatprep.subr.mxu0 0.0
    %793 = vmatpush1.msra.mxu0 0.0
    %794 = vmatprep.subr.mxu0 0.0
    %795 = vmatpush1.msra.mxu0 0.0
    %796 = vmatprep.subr.mxu0 0.0
    %797 = vmatpush1.msra.mxu0 0.0
    %798 = vmatprep.subr.mxu0 0.0
    %799 = vmatpush1.msra.mxu0 0.0
    %800 = vmatprep.subr.mxu0 0.0
    %801 = vmatpush1.msra.mxu0 0.0
    %802 = vmatprep.subr.mxu0 0.0
    %803 = vmatpush1.msra.mxu0 0.0
    %804 = vmatprep.subr.mxu0 0.0
    %805 = vmatpush1.msra.mxu0 0.0
    %806 = vmatprep.subr.mxu0 0.0
    %807 = vmatpush1.msra.mxu0 0.0
    %808 = vmatprep.subr.mxu0 0.0
    %809 = vmatpush1.msra.mxu0 0.0
    %810 = vmatprep.subr.mxu0 0.0
    %811 = vmatpush1.msra.mxu0 0.0
    %812 = vmatprep.subr.mxu0 0.0
    %813 = vmatpush1.msra.mxu0 0.0
    %814 = vmatprep.subr.mxu0 0.0
    %815 = vmatpush1.msra.mxu0 0.0
    %816 = vmatprep.subr.mxu0 0.0
    %817 = vmatpush1.msra.mxu0 0.0
    %818 = vmatprep.subr.mxu0 0.0
    %819 = vmatpush1.msra.mxu0 0.0
    %820 = vmatprep.subr.mxu0 0.0
    %821 = vmatpush1.msra.mxu0 0.0
    %822 = vmatprep.mubr.f32.mxu0 0.0
    %823 = vmatmul.mubr.f32.gmra.mrb[0].mxu0 %v756
    %v824 = vpop.f32.mrb[0].mxu0
    %v825 = vadd.f32 0.0, %v824
    %v826 = vpop.f32.mrb[0].mxu0
    %827 = vdwg.mxu0
    %829 = vrot.lane.b32.xlu0 %v825, 16
    %v830 = vpop.permute.xlu0 %829
    %832 = vst.msk [vmem:[#allocation2 + $0x8] sm:$0xff] %vm494, %v830
    %v833 = vld [vmem:[#allocation2] sm:$0xff]
    %v834 = vld [vmem:[#allocation2 + $0x8] sm:$0xff]
    %v835 = vld [vmem:[%s3] sm:$0xff]
    %v836 = vld [vmem:[%s3 + $0x8] sm:$0xff]
    %v837 = vld [vmem:[%s3 + $0x10] sm:$0xff]
    %v838 = vld [vmem:[%s3 + $0x18] sm:$0xff]
    %v839 = vld [vmem:[%s4] sm:$0x1]
    %v841 = vlaneseq
    %v842 = vshrl.u32 %v841, 7
    %v843 = vsub.s32 0, %v842
    %v844 = vrot.slane %v839, %v843
    %v847 = vsel %vm41, %v833, 0
    %v850 = vsel %vm41, %v834, 0
    %852 = vmatprep.subr.mxu0 0.0
    %853 = vmatpush1.msra.mxu0 %v835
    %854 = vmatprep.subr.mxu0 0.0
    %855 = vmatpush1.msra.mxu0 %v836
    %856 = vmatprep.subr.mxu0 0.0
    %857 = vmatpush1.msra.mxu0 %v837
    %858 = vmatprep.subr.mxu0 0.0
    %859 = vmatpush1.msra.mxu0 %v838
    %860 = vmatprep.subr.mxu0 0.0
    %861 = vmatpush1.msra.mxu0 0.0
    %862 = vmatprep.subr.mxu0 0.0
    %863 = vmatpush1.msra.mxu0 0.0
    %864 = vmatprep.subr.mxu0 0.0
    %865 = vmatpush1.msra.mxu0 0.0
    %866 = vmatprep.subr.mxu0 0.0
    %867 = vmatpush1.msra.mxu0 0.0
    %868 = vmatprep.subr.mxu0 0.0
    %869 = vmatpush1.msra.mxu0 0.0
    %870 = vmatprep.subr.mxu0 0.0
    %871 = vmatpush1.msra.mxu0 0.0
    %872 = vmatprep.subr.mxu0 0.0
    %873 = vmatpush1.msra.mxu0 0.0
    %874 = vmatprep.subr.mxu0 0.0
    %875 = vmatpush1.msra.mxu0 0.0
    %876 = vmatprep.subr.mxu0 0.0
    %877 = vmatpush1.msra.mxu0 0.0
    %878 = vmatprep.subr.mxu0 0.0
    %879 = vmatpush1.msra.mxu0 0.0
    %880 = vmatprep.subr.mxu0 0.0
    %881 = vmatpush1.msra.mxu0 0.0
    %882 = vmatprep.subr.mxu0 0.0
    %883 = vmatpush1.msra.mxu0 0.0
    %884 = vmatprep.subr.mxu0 0.0
    %885 = vmatpush1.msra.mxu0 0.0
    %886 = vmatprep.subr.mxu0 0.0
    %887 = vmatpush1.msra.mxu0 0.0
    %888 = vmatprep.subr.mxu0 0.0
    %889 = vmatpush1.msra.mxu0 0.0
    %890 = vmatprep.subr.mxu0 0.0
    %891 = vmatpush1.msra.mxu0 0.0
    %892 = vmatprep.subr.mxu0 0.0
    %893 = vmatpush1.msra.mxu0 0.0
    %894 = vmatprep.subr.mxu0 0.0
    %895 = vmatpush1.msra.mxu0 0.0
    %896 = vmatprep.subr.mxu0 0.0
    %897 = vmatpush1.msra.mxu0 0.0
    %898 = vmatprep.subr.mxu0 0.0
    %899 = vmatpush1.msra.mxu0 0.0
    %900 = vmatprep.subr.mxu0 0.0
    %901 = vmatpush1.msra.mxu0 0.0
    %902 = vmatprep.subr.mxu0 0.0
    %903 = vmatpush1.msra.mxu0 0.0
    %904 = vmatprep.subr.mxu0 0.0
    %905 = vmatpush1.msra.mxu0 0.0
    %906 = vmatprep.subr.mxu0 0.0
    %907 = vmatpush1.msra.mxu0 0.0
    %908 = vmatprep.subr.mxu0 0.0
    %909 = vmatpush1.msra.mxu0 0.0
    %910 = vmatprep.subr.mxu0 0.0
    %911 = vmatpush1.msra.mxu0 0.0
    %912 = vmatprep.subr.mxu0 0.0
    %913 = vmatpush1.msra.mxu0 0.0
    %914 = vmatprep.subr.mxu0 0.0
    %915 = vmatpush1.msra.mxu0 0.0
    %916 = vmatprep.mubr.f32.mxu0 0.0
    %917 = vmatmul.mubr.f32.gmra.mrb[0].mxu0 %v847
    %v918 = vpop.f32.mrb[0].mxu0
    %v919 = vadd.f32 %v844, %v918
    %v920 = vpop.f32.mrb[0].mxu0
    %921 = vmatprep.mubr.f32.mxu0 0.0
    %922 = vmatmul.mubr.f32.gmra.mrb[0].mxu0 %v850
    %v923 = vpop.f32.mrb[0].mxu0
    %v924 = vadd.f32 %v844, %v923
    %v925 = vpop.f32.mrb[0].mxu0
    %926 = vdwg.mxu0
    %927 = vst.msk [vmem:[#allocation3] sm:$0xff] %vm41, %v919
    %928 = vst.msk [vmem:[#allocation3 + $0x8] sm:$0xff] %vm41, %v924
    // Predicated region
    $region26: #{tpu_custom_call.1} parent=1 // pred_check
      _
    $region27: #{tpu_custom_call.1} parent=1 // pred_check_branch
      %930 = sbr.rel (0) target = $region29
    $region28: #{tpu_custom_call.1} parent=1 // pred_region
      %s932 = ssub.s32 256, 256
      %933 = vsyncadd [#allocation4], %s932
      %s934 = sshll.u32 [#allocation3], 4
      %s935 = int_to_ptr.vmem [resolvable:$true] %s934
      %940 = dma.vmem_to_hbm [thread:$0]  %s935, 256, %s6, [#allocation4], 128, 128, 8
    $region29: #{tpu_custom_call.1} parent=1 // pred_fallthru
      _
    // Predicated region
    $region30: #{tpu_custom_call.1} parent=1 // pred_check
      _
    $region31: #{tpu_custom_call.1} parent=1 // pred_check_branch
      %942 = sbr.rel (0) target = $region33
    $region32: #{tpu_custom_call.1} parent=1 // pred_region
      %943 = dma.done [#allocation4], 256
    $region33: #{tpu_custom_call.1} parent=1 // pred_fallthru
      _
    %944 = vsyncpa [#allocation4], 1

</llo_original>
